<compile_context>
chip_gen: v5e
topology: v5e:2x2
jax: 0.10.0
libtpu: 0.0.40
codegen_flags: <defaults>
</compile_context>

<pallas_src>
import numpy as np
import jax
import jax.numpy as jnp
from jax import lax
from jax.experimental import pallas as pl
from jax.experimental.pallas import tpu as pltpu


def _sinusoidal_pos_encoding(max_len, d_model, dtype=jnp.float32):
    """Standard Transformer PositionalEncoding table (plain numpy glue, built once)."""
    pos = np.arange(max_len, dtype=np.float32)[:, None]                  # (L, 1)
    i = np.arange(0, d_model, 2, dtype=np.float32)                       # (D/2,)
    div = np.exp(-np.log(10000.0) * i / float(d_model))                  # (D/2,)
    pe = np.zeros((max_len, d_model), dtype=np.float32)
    pe[:, 0::2] = np.sin(pos * div)
    pe[:, 1::2] = np.cos(pos * div)
    return jnp.asarray(pe, dtype=dtype)


def _pick_token_tile(seq_len, target=1024):
    """Largest TQ <= target that divides seq_len and is a multiple of 8 (sublane-full)."""
    assert seq_len % 8 == 0, "seq_len must be a multiple of 8 for sublane-full tiles"
    tq = 8
    for cand in range(8, min(target, seq_len) + 1, 8):
        if seq_len % cand == 0:
            tq = cand
    return tq


def _round_up(x, m):
    return (x + m - 1) // m * m


def _split_f32_to_bf16_planes(table_f32):
    """3-way bf16 split: hi + mid + lo reconstructs the f32 values to ~1 ulp."""
    x = table_f32.astype(jnp.float32)
    hi = x.astype(jnp.bfloat16)
    r1 = x - hi.astype(jnp.float32)
    mid = r1.astype(jnp.bfloat16)
    r2 = r1 - mid.astype(jnp.float32)
    lo = r2.astype(jnp.bfloat16)
    return jnp.stack([hi, mid, lo], axis=0)        # (3, V, D) bf16


def fus_embeddings(input_idx, emb_table, pe_table, *, token_tile=1024):
    """Pallas equivalent of Fus_Embeddings.forward.

    input_idx: [B, S] int token ids
    emb_table: [V, D] float32 (nn.Embedding weight)
    pe_table:  [L, D] float32 sinusoidal PE table with L >= S (sliced to S here)
    returns:   [B, S, D] float32
    """
    B, S = input_idx.shape
    V, D = emb_table.shape
    assert pe_table.shape[0] >= S and pe_table.shape[1] == D
    pe_s = pe_table[:S].astype(jnp.float32)

    TQ = _pick_token_tile(S, token_tile)
    num_s_tiles = S // TQ

    # Pad the vocab (matmul contraction dim) to the v6e/v7x MXU K granularity.  Padded rows
    # are zero, so they never contribute and out-of-range ids land on a zero row (no OOB).
    Vp = max(_round_up(V, 256), 256)

    # One-time weight transform (in practice cached alongside the parameters).
    emb3 = _split_f32_to_bf16_planes(emb_table)                      # (3, V, D) bf16
    if Vp != V:
        emb3 = jnp.pad(emb3, ((0, 0), (0, Vp - V), (0, 0)))          # (3, Vp, D)

    idx3 = input_idx.astype(jnp.int32).reshape(B, S, 1)              # tiled VMEM ids

    out_dtype = jnp.float32

    def kernel(idx_ref, emb_ref, pe_ref, out_ref):
        # idx_ref: (TQ, 1) int32       VMEM token-id tile
        # emb_ref: (3, Vp, D) bf16     VMEM-resident split table (constant block index)
        # pe_ref:  (TQ, D) f32         resident across the inner (batch) grid axis
        # out_ref: (TQ, D) f32
        tok = idx_ref[...]                                            # (TQ, 1)
        col = lax.broadcasted_iota(jnp.int32, (TQ, Vp), 1)            # (TQ, Vp)
        onehot = jnp.where(col == tok, 1.0, 0.0).astype(jnp.bfloat16)
        acc = pe_ref[...]                                             # fused PE add
        for p in range(3):                                            # hi / mid / lo planes
            acc = acc + jnp.dot(onehot, emb_ref[p],
                                preferred_element_type=jnp.float32)
        out_ref[...] = acc.astype(out_ref.dtype)

    def build_call(single_buffer_table):
        table_kwargs = {}
        if single_buffer_table:
            # Grid-invariant block index -> one resident copy is enough.
            table_kwargs = dict(pipeline_mode=pl.Buffered(1))

        grid_spec = pltpu.PrefetchScalarGridSpec(
            num_scalar_prefetch=0,
            grid=(num_s_tiles, B),                    # batch innermost -> PE tile stays resident
            in_specs=[
                pl.BlockSpec((None, TQ, 1), lambda s, b: (b, s, 0)),
                pl.BlockSpec((3, Vp, D), lambda s, b: (0, 0, 0), **table_kwargs),
                pl.BlockSpec((TQ, D), lambda s, b: (s, 0)),
            ],
            out_specs=pl.BlockSpec((None, TQ, D), lambda s, b: (b, s, 0)),
        )

        table_bytes = 3 * Vp * D * 2                                  # bf16 planes
        tile_bytes = TQ * D * 4                                       # f32 pe / out tiles
        idx_bytes = TQ * 128 * 4                                      # lane-padded id tile
        n_table_bufs = 1 if single_buffer_table else 2
        est = n_table_bufs * table_bytes + 2 * (2 * tile_bytes + idx_bytes) + (1 << 20)

        try:
            vmem_cap = int(pltpu.get_tpu_info().vmem_capacity_bytes)
        except Exception:
            vmem_cap = 64 * 1024 * 1024                               # conservative v7x per-core
        if est > vmem_cap:
            # TODO(synk): for vocabularies too large for VMEM residency, keep the table in HBM
            # (memory_space=pl.ANY) and row-gather with a ring of overlapped pltpu.make_async_copy.
            raise NotImplementedError("embedding table does not fit in VMEM on this chip")
        vmem_limit = int(min(max(est, 32 * 1024 * 1024), vmem_cap))

        return pl.pallas_call(
            kernel,
            out_shape=jax.ShapeDtypeStruct((B, S, D), out_dtype),
            grid_spec=grid_spec,
            compiler_params=pltpu.CompilerParams(
                dimension_semantics=("parallel", "parallel"),
                vmem_limit_bytes=vmem_limit,
            ),
        )

    try:
        out = build_call(single_buffer_table=True)(idx3, emb3, pe_s)
        out = jax.block_until_ready(out)
    except NotImplementedError:
        raise
    except Exception:
        # pl.Buffered(1) pipeline_mode unavailable on this runtime -> default double buffering.
        out = build_call(single_buffer_table=False)(idx3, emb3, pe_s)
        out = jax.block_until_ready(out)
    return out


if __name__ == "__main__":
    # Small shapes consistent with the module: batch=2, seq_len=8, vocab=64, d_model=128.
    B, S = 2, 8
    n_src_embeddings, d_model = 64, 128
    max_len = 16                                      # PE table longer than S (sliced inside)

    key = jax.random.PRNGKey(0)
    k_emb, k_idx = jax.random.split(key)

    emb_table = jax.random.normal(k_emb, (n_src_embeddings, d_model), dtype=jnp.float32)
    pe_table = _sinusoidal_pos_encoding(max_len, d_model)
    input_idx = jax.random.randint(k_idx, (B, S), 0, n_src_embeddings, dtype=jnp.int32)

    out = fus_embeddings(input_idx, emb_table, pe_table)
    out = jax.block_until_ready(out)

    # Reference check: exact embedding gather + positional encoding add.
    ref = emb_table[input_idx] + pe_table[:S][None, :, :]
    assert out.shape == (B, S, d_model)
    assert jnp.allclose(out, ref, atol=1e-5, rtol=1e-5), "mismatch vs reference"

    print("KERNEL_OK")
</pallas_src>

<mosaic_0001>
module attributes {stable_mosaic.version = 11 : i64} {
  func.func @kernel(%arg0: i32, %arg1: i32, %arg2: memref<1x8x1xi32, #tpu.memory_space<vmem>>, %arg3: memref<3x256x128xbf16, #tpu.memory_space<vmem>>, %arg4: memref<8x128xf32, #tpu.memory_space<vmem>>, %arg5: memref<1x8x128xf32, #tpu.memory_space<vmem>>) attributes {dimension_semantics = [#tpu.dimension_semantics<parallel>, #tpu.dimension_semantics<parallel>], iteration_bounds = array<i64: 1, 2>, scalar_prefetch = 0 : i64, scratch_operands = 0 : i64, tpu.core_type = #tpu.core_type<tc>, window_params = [{transform_indices = @transform_0, window_bounds = array<i64: 1, 8, 1>}, {pipeline_mode = #tpu.pipeline_mode<synchronous>, transform_indices = @transform_1, window_bounds = array<i64: 3, 256, 128>}, {transform_indices = @transform_2, window_bounds = array<i64: 8, 128>}, {transform_indices = @transform_3, window_bounds = array<i64: 1, 8, 128>}]} {
    %c0 = arith.constant 0 : index
    %c0_0 = arith.constant 0 : index
    %c0_1 = arith.constant 0 : index
    %0 = vector.load %arg2[%c0, %c0_0, %c0_1] : memref<1x8x1xi32, #tpu.memory_space<vmem>>, vector<1x8x1xi32>
    %1 = vector.shape_cast %0 : vector<1x8x1xi32> to vector<8x1xi32>
    %2 = tpu.iota {dimensions = array<i32: 1>} : vector<8x256xi32>
    %3 = vector.broadcast %1 : vector<8x1xi32> to vector<8x256xi32>
    %4 = arith.cmpi eq, %2, %3 : vector<8x256xi32>
    %cst = arith.constant 1.000000e+00 : f32
    %cst_2 = arith.constant 0.000000e+00 : f32
    %5 = vector.broadcast %cst : f32 to vector<8x256xf32>
    %6 = vector.broadcast %cst_2 : f32 to vector<8x256xf32>
    %7 = arith.select %4, %5, %6 : vector<8x256xi1>, vector<8x256xf32>
    %8 = arith.truncf %7 : vector<8x256xf32> to vector<8x256xbf16>
    %c0_3 = arith.constant 0 : index
    %c0_4 = arith.constant 0 : index
    %9 = vector.load %arg4[%c0_3, %c0_4] : memref<8x128xf32, #tpu.memory_space<vmem>>, vector<8x128xf32>
    %c0_5 = arith.constant 0 : index
    %c0_6 = arith.constant 0 : index
    %c0_7 = arith.constant 0 : index
    %10 = vector.load %arg3[%c0_5, %c0_6, %c0_7] : memref<3x256x128xbf16, #tpu.memory_space<vmem>>, vector<1x256x128xbf16>
    %11 = vector.shape_cast %10 : vector<1x256x128xbf16> to vector<256x128xbf16>
    %cst_8 = arith.constant dense<0.000000e+00> : vector<8x128xf32>
    %12 = tpu.matmul %8, %11, %cst_8 {dimension_numbers = #tpu.dot_dimension_numbers<[1], [0], [0], [1], [0, 0, 1, 1], [], []>} : vector<8x256xbf16>, vector<256x128xbf16>, vector<8x128xf32> -> vector<8x128xf32>
    %13 = arith.addf %9, %12 : vector<8x128xf32>
    %c1 = arith.constant 1 : index
    %c0_9 = arith.constant 0 : index
    %c0_10 = arith.constant 0 : index
    %14 = vector.load %arg3[%c1, %c0_9, %c0_10] : memref<3x256x128xbf16, #tpu.memory_space<vmem>>, vector<1x256x128xbf16>
    %15 = vector.shape_cast %14 : vector<1x256x128xbf16> to vector<256x128xbf16>
    %cst_11 = arith.constant dense<0.000000e+00> : vector<8x128xf32>
    %16 = tpu.matmul %8, %15, %cst_11 {dimension_numbers = #tpu.dot_dimension_numbers<[1], [0], [0], [1], [0, 0, 1, 1], [], []>} : vector<8x256xbf16>, vector<256x128xbf16>, vector<8x128xf32> -> vector<8x128xf32>
    %17 = arith.addf %13, %16 : vector<8x128xf32>
    %c2 = arith.constant 2 : index
    %c0_12 = arith.constant 0 : index
    %c0_13 = arith.constant 0 : index
    %18 = vector.load %arg3[%c2, %c0_12, %c0_13] : memref<3x256x128xbf16, #tpu.memory_space<vmem>>, vector<1x256x128xbf16>
    %19 = vector.shape_cast %18 : vector<1x256x128xbf16> to vector<256x128xbf16>
    %cst_14 = arith.constant dense<0.000000e+00> : vector<8x128xf32>
    %20 = tpu.matmul %8, %19, %cst_14 {dimension_numbers = #tpu.dot_dimension_numbers<[1], [0], [0], [1], [0, 0, 1, 1], [], []>} : vector<8x256xbf16>, vector<256x128xbf16>, vector<8x128xf32> -> vector<8x128xf32>
    %21 = arith.addf %17, %20 : vector<8x128xf32>
    %c0_15 = arith.constant 0 : index
    %c0_16 = arith.constant 0 : index
    %c0_17 = arith.constant 0 : index
    %22 = vector.load %arg5[%c0_15, %c0_16, %c0_17] : memref<1x8x128xf32, #tpu.memory_space<vmem>>, vector<1x8x128xf32>
    %23 = vector.shape_cast %22 : vector<1x8x128xf32> to vector<8x128xf32>
    %24 = vector.shape_cast %21 : vector<8x128xf32> to vector<1x8x128xf32>
    tpu.vector_store %arg5[%c0_15, %c0_16, %c0_17], %24 {strides = array<i32>} : memref<1x8x128xf32, #tpu.memory_space<vmem>>, vector<1x8x128xf32>,
    return
  }
  func.func @transform_0(%arg0: i32, %arg1: i32) -> (i32, i32, i32) {
    %c0_i32 = arith.constant 0 : i32
    %c0_i32_0 = arith.constant 0 : i32
    return %arg1, %arg0, %c0_i32 : i32, i32, i32
  }
  func.func @transform_1(%arg0: i32, %arg1: i32) -> (i32, i32, i32) {
    %c0_i32 = arith.constant 0 : i32
    %c0_i32_0 = arith.constant 0 : i32
    %c0_i32_1 = arith.constant 0 : i32
    %c0_i32_2 = arith.constant 0 : i32
    return %c0_i32, %c0_i32_0, %c0_i32_1 : i32, i32, i32
  }
  func.func @transform_2(%arg0: i32, %arg1: i32) -> (i32, i32) {
    %c0_i32 = arith.constant 0 : i32
    %c0_i32_0 = arith.constant 0 : i32
    return %arg0, %c0_i32 : i32, i32
  }
  func.func @transform_3(%arg0: i32, %arg1: i32) -> (i32, i32, i32) {
    %c0_i32 = arith.constant 0 : i32
    %c0_i32_0 = arith.constant 0 : i32
    return %arg1, %arg0, %c0_i32 : i32, i32, i32
  }
}

module attributes {stable_mosaic.version = 11 : i64} {
  func.func @kernel(%arg0: i32, %arg1: i32, %arg2: memref<1x8x1xi32, #tpu.memory_space<vmem>>, %arg3: memref<3x256x128xbf16, #tpu.memory_space<vmem>>, %arg4: memref<8x128xf32, #tpu.memory_space<vmem>>, %arg5: memref<1x8x128xf32, #tpu.memory_space<vmem>>) attributes {dimension_semantics = [#tpu.dimension_semantics<parallel>, #tpu.dimension_semantics<parallel>], iteration_bounds = array<i64: 1, 2>, scalar_prefetch = 0 : i64, scratch_operands = 0 : i64, tpu.core_type = #tpu.core_type<tc>, window_params = [{transform_indices = @transform_0, window_bounds = array<i64: 1, 8, 1>}, {pipeline_mode = #tpu.pipeline_mode<synchronous>, transform_indices = @transform_1, window_bounds = array<i64: 3, 256, 128>}, {transform_indices = @transform_2, window_bounds = array<i64: 8, 128>}, {transform_indices = @transform_3, window_bounds = array<i64: 1, 8, 128>}]} {
    %c0 = arith.constant 0 : index
    %c0_0 = arith.constant 0 : index
    %c0_1 = arith.constant 0 : index
    %0 = vector.load %arg2[%c0, %c0_0, %c0_1] : memref<1x8x1xi32, #tpu.memory_space<vmem>>, vector<1x8x1xi32>
    %1 = vector.shape_cast %0 : vector<1x8x1xi32> to vector<8x1xi32>
    %2 = tpu.iota {dimensions = array<i32: 1>} : vector<8x256xi32>
    %3 = vector.broadcast %1 : vector<8x1xi32> to vector<8x256xi32>
    %4 = arith.cmpi eq, %2, %3 : vector<8x256xi32>
    %cst = arith.constant 1.000000e+00 : f32
    %cst_2 = arith.constant 0.000000e+00 : f32
    %5 = vector.broadcast %cst : f32 to vector<8x256xf32>
    %6 = vector.broadcast %cst_2 : f32 to vector<8x256xf32>
    %7 = arith.select %4, %5, %6 : vector<8x256xi1>, vector<8x256xf32>
    %8 = arith.truncf %7 : vector<8x256xf32> to vector<8x256xbf16>
    %c0_3 = arith.constant 0 : index
    %c0_4 = arith.constant 0 : index
    %9 = vector.load %arg4[%c0_3, %c0_4] : memref<8x128xf32, #tpu.memory_space<vmem>>, vector<8x128xf32>
    %c0_5 = arith.constant 0 : index
    %c0_6 = arith.constant 0 : index
    %c0_7 = arith.constant 0 : index
    %10 = vector.load %arg3[%c0_5, %c0_6, %c0_7] : memref<3x256x128xbf16, #tpu.memory_space<vmem>>, vector<1x256x128xbf16>
    %11 = vector.shape_cast %10 : vector<1x256x128xbf16> to vector<256x128xbf16>
    %cst_8 = arith.constant dense<0.000000e+00> : vector<8x128xf32>
    %12 = tpu.matmul %8, %11, %cst_8 {dimension_numbers = #tpu.dot_dimension_numbers<[1], [0], [0], [1], [0, 0, 1, 1], [], []>} : vector<8x256xbf16>, vector<256x128xbf16>, vector<8x128xf32> -> vector<8x128xf32>
    %13 = arith.addf %9, %12 : vector<8x128xf32>
    %c1 = arith.constant 1 : index
    %c0_9 = arith.constant 0 : index
    %c0_10 = arith.constant 0 : index
    %14 = vector.load %arg3[%c1, %c0_9, %c0_10] : memref<3x256x128xbf16, #tpu.memory_space<vmem>>, vector<1x256x128xbf16>
    %15 = vector.shape_cast %14 : vector<1x256x128xbf16> to vector<256x128xbf16>
    %cst_11 = arith.constant dense<0.000000e+00> : vector<8x128xf32>
    %16 = tpu.matmul %8, %15, %cst_11 {dimension_numbers = #tpu.dot_dimension_numbers<[1], [0], [0], [1], [0, 0, 1, 1], [], []>} : vector<8x256xbf16>, vector<256x128xbf16>, vector<8x128xf32> -> vector<8x128xf32>
    %17 = arith.addf %13, %16 : vector<8x128xf32>
    %c2 = arith.constant 2 : index
    %c0_12 = arith.constant 0 : index
    %c0_13 = arith.constant 0 : index
    %18 = vector.load %arg3[%c2, %c0_12, %c0_13] : memref<3x256x128xbf16, #tpu.memory_space<vmem>>, vector<1x256x128xbf16>
    %19 = vector.shape_cast %18 : vector<1x256x128xbf16> to vector<256x128xbf16>
    %cst_14 = arith.constant dense<0.000000e+00> : vector<8x128xf32>
    %20 = tpu.matmul %8, %19, %cst_14 {dimension_numbers = #tpu.dot_dimension_numbers<[1], [0], [0], [1], [0, 0, 1, 1], [], []>} : vector<8x256xbf16>, vector<256x128xbf16>, vector<8x128xf32> -> vector<8x128xf32>
    %21 = arith.addf %17, %20 : vector<8x128xf32>
    %c0_15 = arith.constant 0 : index
    %c0_16 = arith.constant 0 : index
    %c0_17 = arith.constant 0 : index
    %22 = vector.load %arg5[%c0_15, %c0_16, %c0_17] : memref<1x8x128xf32, #tpu.memory_space<vmem>>, vector<1x8x128xf32>
    %23 = vector.shape_cast %22 : vector<1x8x128xf32> to vector<8x128xf32>
    %24 = vector.shape_cast %21 : vector<8x128xf32> to vector<1x8x128xf32>
    tpu.vector_store %arg5[%c0_15, %c0_16, %c0_17], %24 {strides = array<i32>} : memref<1x8x128xf32, #tpu.memory_space<vmem>>, vector<1x8x128xf32>,
    return
  }
  func.func @transform_0(%arg0: i32, %arg1: i32) -> (i32, i32, i32) {
    %c0_i32 = arith.constant 0 : i32
    %c0_i32_0 = arith.constant 0 : i32
    return %arg1, %arg0, %c0_i32 : i32, i32, i32
  }
  func.func @transform_1(%arg0: i32, %arg1: i32) -> (i32, i32, i32) {
    %c0_i32 = arith.constant 0 : i32
    %c0_i32_0 = arith.constant 0 : i32
    %c0_i32_1 = arith.constant 0 : i32
    %c0_i32_2 = arith.constant 0 : i32
    return %c0_i32, %c0_i32_0, %c0_i32_1 : i32, i32, i32
  }
  func.func @transform_2(%arg0: i32, %arg1: i32) -> (i32, i32) {
    %c0_i32 = arith.constant 0 : i32
    %c0_i32_0 = arith.constant 0 : i32
    return %arg0, %c0_i32 : i32, i32
  }
  func.func @transform_3(%arg0: i32, %arg1: i32) -> (i32, i32, i32) {
    %c0_i32 = arith.constant 0 : i32
    %c0_i32_0 = arith.constant 0 : i32
    return %arg1, %arg0, %c0_i32 : i32, i32, i32
  }
}

</mosaic_0001>

<llo_original>
// kernel: tpu_custom_call.1
$region0: #{tpu_custom_call.1}
  #allocation0 [shape = 'u32[]', space=smem, size = 0x4, offset = 0x4, fixed_abs, tag = 'smem constant byte address 0x4 - core index']
  #allocation1 [shape = 'u32[72,128]{1,0:T(1,128)}', space=vmem, size = 0x9000, scoped, tag = 'internal scratch']
  %s0 = inlined_call_operand.vmem [shape: s32[2,8,1], index: 0, kind: input, shape index: {}]
  %s1 = inlined_call_operand.hbm [shape: bf16[3,256,128], index: 1, kind: input, shape index: {}]
  %s2 = inlined_call_operand.vmem [shape: f32[8,128], index: 2, kind: input, shape index: {}]
  %s3 = inlined_call_operand.hbm [shape: f32[2,8,128], index: 3, kind: output, shape index: {}]
  %s4 = sld [smem:[#allocation0]]
  $region49: #{tpu_custom_call.1} parent=0
    _
  %s6 = ssub.s32 1, %s4
  %s7 = scalar_select 0, %s6, %s4
  $region1: #{tpu_custom_call.1} parent=0
    #allocation2 [shape = 'u8[196608]{0}', space=vmem, size = 0x30000, scoped, tag = 'input window, operand 1, single buffered']
    #allocation3 [shape = 's32[2]{0}', space=sflag, size = 0x8, scoped, tag = 'scoped memory for tpu_custom_call.1']
    #allocation4 [shape = 's32[2]{0}', space=sflag, size = 0x8, scoped, tag = 'scoped memory for tpu_custom_call.1']
    #allocation5 [shape = 'u8[8192]{0}', space=vmem, size = 0x2000, scoped, tag = 'output window, operand 0']
    %8 = vsyncpa [#allocation3], 0
    %9 = vsyncpa [#allocation4], 0
    %s10 = scalar_lea.sflag [#allocation4], 1
    %11 = vsyncpa %s10, 0
    loop: start=0, step=1, limit=4
    $region2: #{tpu_custom_call.1} parent=1 // loop_pre_header
      _
    $region3: #{tpu_custom_call.1} parent=1 // loop_header
      %s13 = sphi 0, %s17
      %p14 = scmp.ge.s32.totalorder %s13, 4
      %s20 = sphi 0, %s32
      %s21 = sphi 0, %s28
      %s22 = sphi 0, %s20
      %s23 = sphi 0, %s21
      %s24 = sphi 0, %s22
      %s25 = sphi 0, %s23
      %s37 = sphi 0, %s39
      %s40 = sphi 0, %s37
      %s41 = sphi 0, %s40
      %s57 = sphi 0, %s41
      %s61 = sphi 0, %s61
      %s63 = sphi 0, %s61
      %s64 = sphi 0, %s63
      %s78 = sphi 0, %s64
      %s84 = sphi 0, %s86
      %s87 = sphi 0, %s84
      %s88 = sphi 0, %s87
      %s104 = sphi 0, %s88
      %s112 = sphi 0, %s114
      %s115 = sphi 0, %s112
      %s116 = sphi 0, %s115
      %s132 = sphi 0, %s116
    $region4: #{tpu_custom_call.1} parent=1 // loop_header_branch
      %16 = sbr.rel (%p14) target = $region8
    $region5: #{tpu_custom_call.1} parent=1 // loop_body
      %s18 = ssub.s32 %s13, 1
      %s19 = ssub.s32 %s13, 2
      %s26 = sadd.s32 1, %s21
      %p27 = scmp.ge.s32.totalorder %s26, 2
      %s28 = scalar_select %p27, 0, %s26
      %s29 = sadd.s32 1, %s20
      %s30 = scalar_select %p27, %s29, %s20
      %p31 = scmp.ge.s32.totalorder %s30, 1
      %s32 = scalar_select %p31, 0, %s30
      %s33 = ssub.s32 %s21, %s28
      %s34 = ssub.s32 %s20, %s32
      %s35 = sor.u32 %s33, %s34
      %p36 = scmp.eq.s32.totalorder %s35, 0
      %s38 = sadd.s32 %s37, 1
      %s39 = scalar_select %p36, %s37, %s38
      %p42 = pneg %p36
      %p43 = scmp.eq.s32.totalorder %s13, 1
      %p44 = por %p42, %p43
      %p45 = scmp.ne.s32.totalorder %s37, %s40
      %p46 = scmp.eq.s32.totalorder %s13, 0
      %p47 = por %p45, %p46
      %p48 = scmp.ne.s32.totalorder %s37, %s40
      %p49 = scmp.eq.s32.totalorder %s18, 1
      %p50 = por %p48, %p49
      %p51 = scmp.ne.s32.totalorder %s40, %s41
      %p52 = scmp.eq.s32.totalorder %s18, 0
      %p53 = por %p51, %p52
      %p54 = scmp.ne.s32.totalorder %s40, %s41
      %p55 = scmp.eq.s32.totalorder %s19, 1
      %p56 = por %p54, %p55
      %p58 = scmp.ne.s32.totalorder %s41, %s57
      %p59 = scmp.eq.s32.totalorder %s19, 0
      %p60 = por %p58, %p59
      %s62 = sadd.s32 %s61, 1
      %p65 = scmp.eq.s32.totalorder %s13, 1
      %p66 = scmp.ne.s32.totalorder %s61, %s63
      %p67 = scmp.eq.s32.totalorder %s13, 0
      %p68 = por %p66, %p67
      %p69 = scmp.ne.s32.totalorder %s61, %s63
      %p70 = scmp.eq.s32.totalorder %s18, 1
      %p71 = por %p69, %p70
      %p72 = scmp.ne.s32.totalorder %s63, %s64
      %p73 = scmp.eq.s32.totalorder %s18, 0
      %p74 = por %p72, %p73
      %p75 = scmp.ne.s32.totalorder %s63, %s64
      %p76 = scmp.eq.s32.totalorder %s19, 1
      %p77 = por %p75, %p76
      %p79 = scmp.ne.s32.totalorder %s64, %s78
      %p80 = scmp.eq.s32.totalorder %s19, 0
      %p81 = por %p79, %p80
      %s82 = ssub.s32 %s20, %s32
      %p83 = scmp.eq.s32.totalorder %s82, 0
      %s85 = sadd.s32 %s84, 1
      %s86 = scalar_select %p83, %s84, %s85
      %p89 = pneg %p83
      %p90 = scmp.eq.s32.totalorder %s13, 1
      %p91 = por %p89, %p90
      %p92 = scmp.ne.s32.totalorder %s84, %s87
      %p93 = scmp.eq.s32.totalorder %s13, 0
      %p94 = por %p92, %p93
      %p95 = scmp.ne.s32.totalorder %s84, %s87
      %p96 = scmp.eq.s32.totalorder %s18, 1
      %p97 = por %p95, %p96
      %p98 = scmp.ne.s32.totalorder %s87, %s88
      %p99 = scmp.eq.s32.totalorder %s18, 0
      %p100 = por %p98, %p99
      %p101 = scmp.ne.s32.totalorder %s87, %s88
      %p102 = scmp.eq.s32.totalorder %s19, 1
      %p103 = por %p101, %p102
      %p105 = scmp.ne.s32.totalorder %s88, %s104
      %p106 = scmp.eq.s32.totalorder %s19, 0
      %p107 = por %p105, %p106
      %s108 = ssub.s32 %s21, %s28
      %s109 = ssub.s32 %s20, %s32
      %s110 = sor.u32 %s108, %s109
      %p111 = scmp.eq.s32.totalorder %s110, 0
      %s113 = sadd.s32 %s112, 1
      %s114 = scalar_select %p111, %s112, %s113
      %p117 = pneg %p111
      %p118 = scmp.eq.s32.totalorder %s13, 1
      %p119 = por %p117, %p118
      %p120 = scmp.ne.s32.totalorder %s112, %s115
      %p121 = scmp.eq.s32.totalorder %s13, 0
      %p122 = por %p120, %p121
      %p123 = scmp.ne.s32.totalorder %s112, %s115
      %p124 = scmp.eq.s32.totalorder %s18, 1
      %p125 = por %p123, %p124
      %p126 = scmp.ne.s32.totalorder %s115, %s116
      %p127 = scmp.eq.s32.totalorder %s18, 0
      %p128 = por %p126, %p127
      %p129 = scmp.ne.s32.totalorder %s115, %s116
      %p130 = scmp.eq.s32.totalorder %s19, 1
      %p131 = por %p129, %p130
      %p133 = scmp.ne.s32.totalorder %s116, %s132
      %p134 = scmp.eq.s32.totalorder %s19, 0
      %p135 = por %p133, %p134
      %p136 = scmp.le.s32.totalorder 1, %s13
      %p137 = scmp.lt.s32.totalorder %s13, 3
      %p138 = pnand %p136, %p137
      %p139 = pneg %p138
      // Predicated region
      $region9: #{tpu_custom_call.1} parent=5 // pred_check
        _
      $region10: #{tpu_custom_call.1} parent=5 // pred_check_branch
        %141 = sbr.rel (%p138) target = $region12
      $region11: #{tpu_custom_call.1} parent=5 // pred_region
        %s142 = ssub.s32 %s13, 1
        // Predicated region
        $region13: #{tpu_custom_call.1} parent=11 // pred_check
          %p143 = pneg %p74
        $region14: #{tpu_custom_call.1} parent=11 // pred_check_branch
          %145 = sbr.rel (%p143) target = $region16
        $region15: #{tpu_custom_call.1} parent=11 // pred_region
          %147 = vsyncadd [#allocation3], 0
          %s148 = sshll.u32 %s1, 4
          %s149 = int_to_ptr.hbm [resolvable:$true] %s148
          %s150 = sshll.u32 [#allocation2], 4
          %s151 = int_to_ptr.vmem [resolvable:$true] %s150
          %156 = dma.hbm_to_vmem [thread:$0]  %s149, 6144, %s151, [#allocation3], 64, 64, 4
        $region16: #{tpu_custom_call.1} parent=11 // pred_fallthru
          _
        // Predicated region
        $region17: #{tpu_custom_call.1} parent=11 // pred_check
          %p157 = pneg %p100
        $region18: #{tpu_custom_call.1} parent=11 // pred_check_branch
          %159 = sbr.rel (%p157) target = $region20
        $region19: #{tpu_custom_call.1} parent=11 // pred_region
          %p160 = scmp.lt.s32.totalorder %s22, 0
          %s161 = scalar_select %p160, %s22, 0
          %s162 = smul.addr %s161, 8
          %s163 = scalar_lea.vmem %s2, %s162
        $region20: #{tpu_custom_call.1} parent=11 // pred_fallthru
          _
      $region12: #{tpu_custom_call.1} parent=5 // pred_fallthru
        _
      %p164 = scmp.lt.s32.totalorder %s13, 2
      // Predicated region
      $region21: #{tpu_custom_call.1} parent=5 // pred_check
        %p165 = pneg %p164
      $region22: #{tpu_custom_call.1} parent=5 // pred_check_branch
        %167 = sbr.rel (%p165) target = $region24
      $region23: #{tpu_custom_call.1} parent=5 // pred_region
        // Predicated region
        $region25: #{tpu_custom_call.1} parent=23 // pred_check
          %p168 = pneg %p47
        $region26: #{tpu_custom_call.1} parent=23 // pred_check_branch
          %170 = sbr.rel (%p168) target = $region28
        $region27: #{tpu_custom_call.1} parent=23 // pred_region
          %p171 = scmp.lt.s32.totalorder %s21, 1
          %s172 = scalar_select %p171, %s21, 1
          %p173 = scmp.lt.s32.totalorder %s20, 0
          %s174 = scalar_select %p173, %s20, 0
          %s175 = sadd.s32 %s174, %s172
          %s176 = smul.addr %s175, 8
          %s177 = scalar_lea.vmem %s0, %s176
        $region28: #{tpu_custom_call.1} parent=23 // pred_fallthru
          _
      $region24: #{tpu_custom_call.1} parent=5 // pred_fallthru
        _
      %p178 = scmp.le.s32.totalorder 1, %s13
      %p179 = scmp.lt.s32.totalorder %s13, 3
      %p180 = pnand %p178, %p179
      %p181 = pneg %p180
      // Predicated region
      $region29: #{tpu_custom_call.1} parent=5 // pred_check
        _
      $region30: #{tpu_custom_call.1} parent=5 // pred_check_branch
        %183 = sbr.rel (%p180) target = $region32
      $region31: #{tpu_custom_call.1} parent=5 // pred_region
        %s184 = ssub.s32 %s13, 1
        // Predicated region
        $region33: #{tpu_custom_call.1} parent=31 // pred_check
          %p185 = pneg %p74
        $region34: #{tpu_custom_call.1} parent=31 // pred_check_branch
          %187 = sbr.rel (%p185) target = $region36
        $region35: #{tpu_custom_call.1} parent=31 // pred_region
          %189 = dma.done [#allocation3], 6144
        $region36: #{tpu_custom_call.1} parent=31 // pred_fallthru
          _
        %p190 = scmp.lt.s32.totalorder %s23, 1
        %s191 = scalar_select %p190, %s23, 1
        %p192 = scmp.lt.s32.totalorder %s22, 0
        %s193 = scalar_select %p192, %s22, 0
        %s194 = sadd.s32 %s193, %s191
        %s195 = smul.addr %s194, 8
        %s196 = scalar_lea.vmem %s0, %s195
        %p197 = pneg %p53
        %p198 = pneg %p50
        %p199 = pneg %p74
        %p200 = pneg %p71
        %p201 = scmp.lt.s32.totalorder %s22, 0
        %s202 = scalar_select %p201, %s22, 0
        %s203 = smul.addr %s202, 8
        %s204 = scalar_lea.vmem %s2, %s203
        %p205 = pneg %p100
        %p206 = pneg %p97
        %p207 = pneg %p128
        %p208 = pneg %p125
        %s209 = sand.u32 %s115, 1
        %s210 = scalar_lea.sflag [#allocation4], %s209
        %s211 = sand.u32 %s115, 1
        %s212 = smul.addr %s211, 8
        %s213 = scalar_lea.vmem [#allocation5], %s212
        %p214 = scmp.lt.s32.totalorder %s23, 1
        %s215 = scalar_select %p214, %s23, 1
        %p216 = scmp.lt.s32.totalorder %s22, 0
        %s217 = scalar_select %p216, %s22, 0
        %s218 = sadd.s32 %s217, %s215
        %s219 = smul.addr %s218, 8
        %s220 = scalar_lea.vmem %s0, %s219
        %p221 = scmp.lt.s32.totalorder %s22, 0
        %s222 = scalar_select %p221, %s22, 0
        %s223 = smul.addr %s222, 8
        %s224 = scalar_lea.vmem %s2, %s223
        %v225 = vld [vmem:[%s220] sm:$0xff]
        %v226 = vlaneseq
        %v227 = vand.u32 %v226, 127
        %v228 = vadd.s32 %v227, 128
        %229 = vset.pattern.permute.xlu0 0
        %230 = vperm.xlu0 %229, %v225
        %v231 = vpop.permute.xlu0 %230
        %vm232 = vcmp.eq.s32.totalorder %v227, %v231
        %vm233 = vcmp.eq.s32.totalorder %v228, %v231
        %v234 = vsel %vm232, 1.0, 0.0
        %v235 = vsel %vm233, 1.0, 0.0
        %v236 = vpack.c.bf16 %v234, %v234
        %v237 = vpack.c.bf16 %v235, %v235
        %v238 = vld [vmem:[%s224] sm:$0xff]
        %v239 = vld [vmem:[#allocation2] sm:$0xf]
        %v240 = vld [vmem:[#allocation2 + $0x4] sm:$0xf]
        %v241 = vld [vmem:[#allocation2 + $0x8] sm:$0xf]
        %v242 = vld [vmem:[#allocation2 + $0xc] sm:$0xf]
        %v243 = vld [vmem:[#allocation2 + $0x10] sm:$0xf]
        %v244 = vld [vmem:[#allocation2 + $0x14] sm:$0xf]
        %v245 = vld [vmem:[#allocation2 + $0x18] sm:$0xf]
        %v246 = vld [vmem:[#allocation2 + $0x1c] sm:$0xf]
        %v247 = vld [vmem:[#allocation2 + $0x20] sm:$0xf]
        %v248 = vld [vmem:[#allocation2 + $0x24] sm:$0xf]
        %v249 = vld [vmem:[#allocation2 + $0x28] sm:$0xf]
        %v250 = vld [vmem:[#allocation2 + $0x2c] sm:$0xf]
        %v251 = vld [vmem:[#allocation2 + $0x30] sm:$0xf]
        %v252 = vld [vmem:[#allocation2 + $0x34] sm:$0xf]
        %v253 = vld [vmem:[#allocation2 + $0x38] sm:$0xf]
        %v254 = vld [vmem:[#allocation2 + $0x3c] sm:$0xf]
        %v255 = vld [vmem:[#allocation2 + $0x40] sm:$0xf]
        %v256 = vld [vmem:[#allocation2 + $0x44] sm:$0xf]
        %v257 = vld [vmem:[#allocation2 + $0x48] sm:$0xf]
        %v258 = vld [vmem:[#allocation2 + $0x4c] sm:$0xf]
        %v259 = vld [vmem:[#allocation2 + $0x50] sm:$0xf]
        %v260 = vld [vmem:[#allocation2 + $0x54] sm:$0xf]
        %v261 = vld [vmem:[#allocation2 + $0x58] sm:$0xf]
        %v262 = vld [vmem:[#allocation2 + $0x5c] sm:$0xf]
        %v263 = vld [vmem:[#allocation2 + $0x60] sm:$0xf]
        %v264 = vld [vmem:[#allocation2 + $0x64] sm:$0xf]
        %v265 = vld [vmem:[#allocation2 + $0x68] sm:$0xf]
        %v266 = vld [vmem:[#allocation2 + $0x6c] sm:$0xf]
        %v267 = vld [vmem:[#allocation2 + $0x70] sm:$0xf]
        %v268 = vld [vmem:[#allocation2 + $0x74] sm:$0xf]
        %v269 = vld [vmem:[#allocation2 + $0x78] sm:$0xf]
        %v270 = vld [vmem:[#allocation2 + $0x7c] sm:$0xf]
        %v303 = vunpack.c.l.b16 %v239
        %v304 = vunpack.c.l.b16 %v240
        %v305 = vunpack.c.l.b16 %v241
        %v306 = vunpack.c.l.b16 %v242
        %v307 = vunpack.c.l.b16 %v243
        %v308 = vunpack.c.l.b16 %v244
        %v309 = vunpack.c.l.b16 %v245
        %v310 = vunpack.c.l.b16 %v246
        %v311 = vunpack.c.l.b16 %v247
        %v312 = vunpack.c.l.b16 %v248
        %v313 = vunpack.c.l.b16 %v249
        %v314 = vunpack.c.l.b16 %v250
        %v315 = vunpack.c.l.b16 %v251
        %v316 = vunpack.c.l.b16 %v252
        %v317 = vunpack.c.l.b16 %v253
        %v318 = vunpack.c.l.b16 %v254
        %v319 = vunpack.c.l.b16 %v255
        %v320 = vunpack.c.l.b16 %v256
        %v321 = vunpack.c.l.b16 %v257
        %v322 = vunpack.c.l.b16 %v258
        %v323 = vunpack.c.l.b16 %v259
        %v324 = vunpack.c.l.b16 %v260
        %v325 = vunpack.c.l.b16 %v261
        %v326 = vunpack.c.l.b16 %v262
        %v327 = vunpack.c.l.b16 %v263
        %v328 = vunpack.c.l.b16 %v264
        %v329 = vunpack.c.l.b16 %v265
        %v330 = vunpack.c.l.b16 %v266
        %v331 = vunpack.c.l.b16 %v267
        %v332 = vunpack.c.l.b16 %v268
        %v333 = vunpack.c.l.b16 %v269
        %v334 = vunpack.c.l.b16 %v270
        %v335 = vpack.c.b16 %v304, %v303
        %v336 = vpack.c.b16 %v306, %v305
        %v337 = vpack.c.b16 %v308, %v307
        %v338 = vpack.c.b16 %v310, %v309
        %v339 = vpack.c.b16 %v312, %v311
        %v340 = vpack.c.b16 %v314, %v313
        %v341 = vpack.c.b16 %v316, %v315
        %v342 = vpack.c.b16 %v318, %v317
        %v343 = vpack.c.b16 %v320, %v319
        %v344 = vpack.c.b16 %v322, %v321
        %v345 = vpack.c.b16 %v324, %v323
        %v346 = vpack.c.b16 %v326, %v325
        %v347 = vpack.c.b16 %v328, %v327
        %v348 = vpack.c.b16 %v330, %v329
        %v349 = vpack.c.b16 %v332, %v331
        %v350 = vpack.c.b16 %v334, %v333
        %367 = vmatpush.bf16.msra.mxu0 %v342
        %368 = vmatpush.bf16.msra.mxu0 %v341
        %369 = vmatpush.bf16.msra.mxu0 %v340
        %370 = vmatpush.bf16.msra.mxu0 %v339
        %371 = vmatpush.bf16.msra.mxu0 %v338
        %372 = vmatpush.bf16.msra.mxu0 %v337
        %373 = vmatpush.bf16.msra.mxu0 %v336
        %374 = vmatpush.bf16.msra.mxu0 %v335
        %375 = vmatmul.bf16.gmra.mxu0 %v236
        %v376 = vpop.f32.mrf.mxu0
        %v377 = vadd.f32 0.0, %v376
        %v378 = vpop.f32.mrf.mxu0
        %379 = vdwg.mxu0
        %380 = vmatpush.bf16.msra.mxu0 %v350
        %381 = vmatpush.bf16.msra.mxu0 %v349
        %382 = vmatpush.bf16.msra.mxu0 %v348
        %383 = vmatpush.bf16.msra.mxu0 %v347
        %384 = vmatpush.bf16.msra.mxu0 %v346
        %385 = vmatpush.bf16.msra.mxu0 %v345
        %386 = vmatpush.bf16.msra.mxu0 %v344
        %387 = vmatpush.bf16.msra.mxu0 %v343
        %388 = vmatmul.bf16.gmra.mxu0 %v237
        %v389 = vpop.f32.mrf.mxu0
        %v390 = vadd.f32 %v377, %v389
        %v391 = vpop.f32.mrf.mxu0
        %392 = vdwg.mxu0
        %v393 = vadd.f32 %v238, %v390
        %s394 = scalar_lea.vmem [#allocation2], 128
        %v395 = vld [vmem:[%s394] sm:$0xf]
        %v396 = vld [vmem:[%s394 + $0x4] sm:$0xf]
        %v397 = vld [vmem:[%s394 + $0x8] sm:$0xf]
        %v398 = vld [vmem:[%s394 + $0xc] sm:$0xf]
        %v399 = vld [vmem:[%s394 + $0x10] sm:$0xf]
        %v400 = vld [vmem:[%s394 + $0x14] sm:$0xf]
        %v401 = vld [vmem:[%s394 + $0x18] sm:$0xf]
        %v402 = vld [vmem:[%s394 + $0x1c] sm:$0xf]
        %v403 = vld [vmem:[%s394 + $0x20] sm:$0xf]
        %v404 = vld [vmem:[%s394 + $0x24] sm:$0xf]
        %v405 = vld [vmem:[%s394 + $0x28] sm:$0xf]
        %v406 = vld [vmem:[%s394 + $0x2c] sm:$0xf]
        %v407 = vld [vmem:[%s394 + $0x30] sm:$0xf]
        %v408 = vld [vmem:[%s394 + $0x34] sm:$0xf]
        %v409 = vld [vmem:[%s394 + $0x38] sm:$0xf]
        %v410 = vld [vmem:[%s394 + $0x3c] sm:$0xf]
        %v411 = vld [vmem:[%s394 + $0x40] sm:$0xf]
        %v412 = vld [vmem:[%s394 + $0x44] sm:$0xf]
        %v413 = vld [vmem:[%s394 + $0x48] sm:$0xf]
        %v414 = vld [vmem:[%s394 + $0x4c] sm:$0xf]
        %v415 = vld [vmem:[%s394 + $0x50] sm:$0xf]
        %v416 = vld [vmem:[%s394 + $0x54] sm:$0xf]
        %v417 = vld [vmem:[%s394 + $0x58] sm:$0xf]
        %v418 = vld [vmem:[%s394 + $0x5c] sm:$0xf]
        %v419 = vld [vmem:[%s394 + $0x60] sm:$0xf]
        %v420 = vld [vmem:[%s394 + $0x64] sm:$0xf]
        %v421 = vld [vmem:[%s394 + $0x68] sm:$0xf]
        %v422 = vld [vmem:[%s394 + $0x6c] sm:$0xf]
        %v423 = vld [vmem:[%s394 + $0x70] sm:$0xf]
        %v424 = vld [vmem:[%s394 + $0x74] sm:$0xf]
        %v425 = vld [vmem:[%s394 + $0x78] sm:$0xf]
        %v426 = vld [vmem:[%s394 + $0x7c] sm:$0xf]
        %v459 = vunpack.c.l.b16 %v395
        %v460 = vunpack.c.l.b16 %v396
        %v461 = vunpack.c.l.b16 %v397
        %v462 = vunpack.c.l.b16 %v398
        %v463 = vunpack.c.l.b16 %v399
        %v464 = vunpack.c.l.b16 %v400
        %v465 = vunpack.c.l.b16 %v401
        %v466 = vunpack.c.l.b16 %v402
        %v467 = vunpack.c.l.b16 %v403
        %v468 = vunpack.c.l.b16 %v404
        %v469 = vunpack.c.l.b16 %v405
        %v470 = vunpack.c.l.b16 %v406
        %v471 = vunpack.c.l.b16 %v407
        %v472 = vunpack.c.l.b16 %v408
        %v473 = vunpack.c.l.b16 %v409
        %v474 = vunpack.c.l.b16 %v410
        %v475 = vunpack.c.l.b16 %v411
        %v476 = vunpack.c.l.b16 %v412
        %v477 = vunpack.c.l.b16 %v413
        %v478 = vunpack.c.l.b16 %v414
        %v479 = vunpack.c.l.b16 %v415
        %v480 = vunpack.c.l.b16 %v416
        %v481 = vunpack.c.l.b16 %v417
        %v482 = vunpack.c.l.b16 %v418
        %v483 = vunpack.c.l.b16 %v419
        %v484 = vunpack.c.l.b16 %v420
        %v485 = vunpack.c.l.b16 %v421
        %v486 = vunpack.c.l.b16 %v422
        %v487 = vunpack.c.l.b16 %v423
        %v488 = vunpack.c.l.b16 %v424
        %v489 = vunpack.c.l.b16 %v425
        %v490 = vunpack.c.l.b16 %v426
        %v491 = vpack.c.b16 %v460, %v459
        %v492 = vpack.c.b16 %v462, %v461
        %v493 = vpack.c.b16 %v464, %v463
        %v494 = vpack.c.b16 %v466, %v465
        %v495 = vpack.c.b16 %v468, %v467
        %v496 = vpack.c.b16 %v470, %v469
        %v497 = vpack.c.b16 %v472, %v471
        %v498 = vpack.c.b16 %v474, %v473
        %v499 = vpack.c.b16 %v476, %v475
        %v500 = vpack.c.b16 %v478, %v477
        %v501 = vpack.c.b16 %v480, %v479
        %v502 = vpack.c.b16 %v482, %v481
        %v503 = vpack.c.b16 %v484, %v483
        %v504 = vpack.c.b16 %v486, %v485
        %v505 = vpack.c.b16 %v488, %v487
        %v506 = vpack.c.b16 %v490, %v489
        %523 = vmatpush.bf16.msra.mxu0 %v498
        %524 = vmatpush.bf16.msra.mxu0 %v497
        %525 = vmatpush.bf16.msra.mxu0 %v496
        %526 = vmatpush.bf16.msra.mxu0 %v495
        %527 = vmatpush.bf16.msra.mxu0 %v494
        %528 = vmatpush.bf16.msra.mxu0 %v493
        %529 = vmatpush.bf16.msra.mxu0 %v492
        %530 = vmatpush.bf16.msra.mxu0 %v491
        %531 = vmatmul.bf16.gmra.mxu0 %v236
        %v532 = vpop.f32.mrf.mxu0
        %v533 = vadd.f32 0.0, %v532
        %v534 = vpop.f32.mrf.mxu0
        %535 = vdwg.mxu0
        %536 = vmatpush.bf16.msra.mxu0 %v506
        %537 = vmatpush.bf16.msra.mxu0 %v505
        %538 = vmatpush.bf16.msra.mxu0 %v504
        %539 = vmatpush.bf16.msra.mxu0 %v503
        %540 = vmatpush.bf16.msra.mxu0 %v502
        %541 = vmatpush.bf16.msra.mxu0 %v501
        %542 = vmatpush.bf16.msra.mxu0 %v500
        %543 = vmatpush.bf16.msra.mxu0 %v499
        %544 = vmatmul.bf16.gmra.mxu0 %v237
        %v545 = vpop.f32.mrf.mxu0
        %v546 = vadd.f32 %v533, %v545
        %v547 = vpop.f32.mrf.mxu0
        %548 = vdwg.mxu0
        %v549 = vadd.f32 %v393, %v546
        %s550 = scalar_lea.vmem [#allocation2], 256
        %v551 = vld [vmem:[%s550] sm:$0xf]
        %v552 = vld [vmem:[%s550 + $0x4] sm:$0xf]
        %v553 = vld [vmem:[%s550 + $0x8] sm:$0xf]
        %v554 = vld [vmem:[%s550 + $0xc] sm:$0xf]
        %v555 = vld [vmem:[%s550 + $0x10] sm:$0xf]
        %v556 = vld [vmem:[%s550 + $0x14] sm:$0xf]
        %v557 = vld [vmem:[%s550 + $0x18] sm:$0xf]
        %v558 = vld [vmem:[%s550 + $0x1c] sm:$0xf]
        %v559 = vld [vmem:[%s550 + $0x20] sm:$0xf]
        %v560 = vld [vmem:[%s550 + $0x24] sm:$0xf]
        %v561 = vld [vmem:[%s550 + $0x28] sm:$0xf]
        %v562 = vld [vmem:[%s550 + $0x2c] sm:$0xf]
        %v563 = vld [vmem:[%s550 + $0x30] sm:$0xf]
        %v564 = vld [vmem:[%s550 + $0x34] sm:$0xf]
        %v565 = vld [vmem:[%s550 + $0x38] sm:$0xf]
        %v566 = vld [vmem:[%s550 + $0x3c] sm:$0xf]
        %v567 = vld [vmem:[%s550 + $0x40] sm:$0xf]
        %v568 = vld [vmem:[%s550 + $0x44] sm:$0xf]
        %v569 = vld [vmem:[%s550 + $0x48] sm:$0xf]
        %v570 = vld [vmem:[%s550 + $0x4c] sm:$0xf]
        %v571 = vld [vmem:[%s550 + $0x50] sm:$0xf]
        %v572 = vld [vmem:[%s550 + $0x54] sm:$0xf]
        %v573 = vld [vmem:[%s550 + $0x58] sm:$0xf]
        %v574 = vld [vmem:[%s550 + $0x5c] sm:$0xf]
        %v575 = vld [vmem:[%s550 + $0x60] sm:$0xf]
        %v576 = vld [vmem:[%s550 + $0x64] sm:$0xf]
        %v577 = vld [vmem:[%s550 + $0x68] sm:$0xf]
        %v578 = vld [vmem:[%s550 + $0x6c] sm:$0xf]
        %v579 = vld [vmem:[%s550 + $0x70] sm:$0xf]
        %v580 = vld [vmem:[%s550 + $0x74] sm:$0xf]
        %v581 = vld [vmem:[%s550 + $0x78] sm:$0xf]
        %v582 = vld [vmem:[%s550 + $0x7c] sm:$0xf]
        %v615 = vunpack.c.l.b16 %v551
        %v616 = vunpack.c.l.b16 %v552
        %v617 = vunpack.c.l.b16 %v553
        %v618 = vunpack.c.l.b16 %v554
        %v619 = vunpack.c.l.b16 %v555
        %v620 = vunpack.c.l.b16 %v556
        %v621 = vunpack.c.l.b16 %v557
        %v622 = vunpack.c.l.b16 %v558
        %v623 = vunpack.c.l.b16 %v559
        %v624 = vunpack.c.l.b16 %v560
        %v625 = vunpack.c.l.b16 %v561
        %v626 = vunpack.c.l.b16 %v562
        %v627 = vunpack.c.l.b16 %v563
        %v628 = vunpack.c.l.b16 %v564
        %v629 = vunpack.c.l.b16 %v565
        %v630 = vunpack.c.l.b16 %v566
        %v631 = vunpack.c.l.b16 %v567
        %v632 = vunpack.c.l.b16 %v568
        %v633 = vunpack.c.l.b16 %v569
        %v634 = vunpack.c.l.b16 %v570
        %v635 = vunpack.c.l.b16 %v571
        %v636 = vunpack.c.l.b16 %v572
        %v637 = vunpack.c.l.b16 %v573
        %v638 = vunpack.c.l.b16 %v574
        %v639 = vunpack.c.l.b16 %v575
        %v640 = vunpack.c.l.b16 %v576
        %v641 = vunpack.c.l.b16 %v577
        %v642 = vunpack.c.l.b16 %v578
        %v643 = vunpack.c.l.b16 %v579
        %v644 = vunpack.c.l.b16 %v580
        %v645 = vunpack.c.l.b16 %v581
        %v646 = vunpack.c.l.b16 %v582
        %v647 = vpack.c.b16 %v616, %v615
        %v648 = vpack.c.b16 %v618, %v617
        %v649 = vpack.c.b16 %v620, %v619
        %v650 = vpack.c.b16 %v622, %v621
        %v651 = vpack.c.b16 %v624, %v623
        %v652 = vpack.c.b16 %v626, %v625
        %v653 = vpack.c.b16 %v628, %v627
        %v654 = vpack.c.b16 %v630, %v629
        %v655 = vpack.c.b16 %v632, %v631
        %v656 = vpack.c.b16 %v634, %v633
        %v657 = vpack.c.b16 %v636, %v635
        %v658 = vpack.c.b16 %v638, %v637
        %v659 = vpack.c.b16 %v640, %v639
        %v660 = vpack.c.b16 %v642, %v641
        %v661 = vpack.c.b16 %v644, %v643
        %v662 = vpack.c.b16 %v646, %v645
        %679 = vmatpush.bf16.msra.mxu0 %v654
        %680 = vmatpush.bf16.msra.mxu0 %v653
        %681 = vmatpush.bf16.msra.mxu0 %v652
        %682 = vmatpush.bf16.msra.mxu0 %v651
        %683 = vmatpush.bf16.msra.mxu0 %v650
        %684 = vmatpush.bf16.msra.mxu0 %v649
        %685 = vmatpush.bf16.msra.mxu0 %v648
        %686 = vmatpush.bf16.msra.mxu0 %v647
        %687 = vmatmul.bf16.gmra.mxu0 %v236
        %v688 = vpop.f32.mrf.mxu0
        %v689 = vadd.f32 0.0, %v688
        %v690 = vpop.f32.mrf.mxu0
        %691 = vdwg.mxu0
        %692 = vmatpush.bf16.msra.mxu0 %v662
        %693 = vmatpush.bf16.msra.mxu0 %v661
        %694 = vmatpush.bf16.msra.mxu0 %v660
        %695 = vmatpush.bf16.msra.mxu0 %v659
        %696 = vmatpush.bf16.msra.mxu0 %v658
        %697 = vmatpush.bf16.msra.mxu0 %v657
        %698 = vmatpush.bf16.msra.mxu0 %v656
        %699 = vmatpush.bf16.msra.mxu0 %v655
        %700 = vmatmul.bf16.gmra.mxu0 %v237
        %v701 = vpop.f32.mrf.mxu0
        %v702 = vadd.f32 %v689, %v701
        %v703 = vpop.f32.mrf.mxu0
        %704 = vdwg.mxu0
        %v705 = vadd.f32 %v549, %v702
        %706 = vst [vmem:[%s213] sm:$0xff] %v705
        %s707 = sand.u32 %s115, 1
        %s708 = scalar_lea.sflag [#allocation4], %s707
        %s709 = sand.u32 %s115, 1
        %s710 = smul.addr %s709, 8
        %s711 = scalar_lea.vmem [#allocation5], %s710
        // Predicated region
        $region37: #{tpu_custom_call.1} parent=31 // pred_check
          %p712 = pneg %p125
        $region38: #{tpu_custom_call.1} parent=31 // pred_check_branch
          %714 = sbr.rel (%p712) target = $region40
        $region39: #{tpu_custom_call.1} parent=31 // pred_region
          %716 = vsyncadd %s708, 0
          %s717 = sadd.s32 %s22, %s23
          %s718 = smul.addr %s717, 8
          %s719 = scalar_lea.hbm %s3, %s718
          %s721 = sshll.u32 %s711, 4
          %s722 = int_to_ptr.vmem [resolvable:$true] %s721
          %s723 = sshll.u32 %s719, 4
          %s724 = int_to_ptr.hbm [resolvable:$true] %s723
          %726 = dma.vmem_to_hbm [thread:$0]  %s722, 128, %s724, %s708
        $region40: #{tpu_custom_call.1} parent=31 // pred_fallthru
          _
      $region32: #{tpu_custom_call.1} parent=5 // pred_fallthru
        _
      %p727 = scmp.le.s32.totalorder 2, %s13
      // Predicated region
      $region41: #{tpu_custom_call.1} parent=5 // pred_check
        %p728 = pneg %p727
      $region42: #{tpu_custom_call.1} parent=5 // pred_check_branch
        %730 = sbr.rel (%p728) target = $region44
      $region43: #{tpu_custom_call.1} parent=5 // pred_region
        %s731 = ssub.s32 %s13, 2
        // Predicated region
        $region45: #{tpu_custom_call.1} parent=43 // pred_check
          %p732 = pneg %p131
        $region46: #{tpu_custom_call.1} parent=43 // pred_check_branch
          %734 = sbr.rel (%p732) target = $region48
        $region47: #{tpu_custom_call.1} parent=43 // pred_region
          %s735 = sand.u32 %s116, 1
          %s736 = scalar_lea.sflag [#allocation4], %s735
          %s737 = sand.u32 %s116, 1
          %s738 = smul.addr %s737, 8
          %s739 = scalar_lea.vmem [#allocation5], %s738
          %741 = dma.done %s736, 128
        $region48: #{tpu_custom_call.1} parent=43 // pred_fallthru
          _
      $region44: #{tpu_custom_call.1} parent=5 // pred_fallthru
        _
    $region6: #{tpu_custom_call.1} parent=1 // loop_footer
      %s17 = sadd.s32 1, %s13
    $region7: #{tpu_custom_call.1} parent=1 // loop_footer_branch
      %12 = sbr.rel target = $region3
    $region8: #{tpu_custom_call.1} parent=1 // loop_exit
      _
    %742 = vsyncpa [#allocation3], 1
    %s743 = scalar_lea.sflag [#allocation3], 1
    %744 = vsyncpa %s743, 1
    %745 = vsyncpa [#allocation4], 1
    %s746 = scalar_lea.sflag [#allocation4], 1
    %747 = vsyncpa %s746, 1

// kernel: tpu_custom_call.1
$region0: #{tpu_custom_call.1}
  #allocation0 [shape = 'u32[]', space=smem, size = 0x4, offset = 0x4, fixed_abs, tag = 'smem constant byte address 0x4 - core index']
  #allocation1 [shape = 'u32[72,128]{1,0:T(1,128)}', space=vmem, size = 0x9000, scoped, tag = 'internal scratch']
  %s0 = inlined_call_operand.vmem [shape: s32[2,8,1], index: 0, kind: input, shape index: {}]
  %s1 = inlined_call_operand.hbm [shape: bf16[3,256,128], index: 1, kind: input, shape index: {}]
  %s2 = inlined_call_operand.vmem [shape: f32[8,128], index: 2, kind: input, shape index: {}]
  %s3 = inlined_call_operand.hbm [shape: f32[2,8,128], index: 3, kind: output, shape index: {}]
  %s4 = sld [smem:[#allocation0]]
  $region49: #{tpu_custom_call.1} parent=0
    _
  %s6 = ssub.s32 1, %s4
  %s7 = scalar_select 0, %s6, %s4
  $region1: #{tpu_custom_call.1} parent=0
    #allocation2 [shape = 'u8[196608]{0}', space=vmem, size = 0x30000, scoped, tag = 'input window, operand 1, single buffered']
    #allocation3 [shape = 's32[2]{0}', space=sflag, size = 0x8, scoped, tag = 'scoped memory for tpu_custom_call.1']
    #allocation4 [shape = 's32[2]{0}', space=sflag, size = 0x8, scoped, tag = 'scoped memory for tpu_custom_call.1']
    #allocation5 [shape = 'u8[8192]{0}', space=vmem, size = 0x2000, scoped, tag = 'output window, operand 0']
    %8 = vsyncpa [#allocation3], 0
    %9 = vsyncpa [#allocation4], 0
    %s10 = scalar_lea.sflag [#allocation4], 1
    %11 = vsyncpa %s10, 0
    loop: start=0, step=1, limit=4
    $region2: #{tpu_custom_call.1} parent=1 // loop_pre_header
      _
    $region3: #{tpu_custom_call.1} parent=1 // loop_header
      %s13 = sphi 0, %s17
      %p14 = scmp.ge.s32.totalorder %s13, 4
      %s20 = sphi 0, %s32
      %s21 = sphi 0, %s28
      %s22 = sphi 0, %s20
      %s23 = sphi 0, %s21
      %s24 = sphi 0, %s22
      %s25 = sphi 0, %s23
      %s37 = sphi 0, %s39
      %s40 = sphi 0, %s37
      %s41 = sphi 0, %s40
      %s57 = sphi 0, %s41
      %s61 = sphi 0, %s61
      %s63 = sphi 0, %s61
      %s64 = sphi 0, %s63
      %s78 = sphi 0, %s64
      %s84 = sphi 0, %s86
      %s87 = sphi 0, %s84
      %s88 = sphi 0, %s87
      %s104 = sphi 0, %s88
      %s112 = sphi 0, %s114
      %s115 = sphi 0, %s112
      %s116 = sphi 0, %s115
      %s132 = sphi 0, %s116
    $region4: #{tpu_custom_call.1} parent=1 // loop_header_branch
      %16 = sbr.rel (%p14) target = $region8
    $region5: #{tpu_custom_call.1} parent=1 // loop_body
      %s18 = ssub.s32 %s13, 1
      %s19 = ssub.s32 %s13, 2
      %s26 = sadd.s32 1, %s21
      %p27 = scmp.ge.s32.totalorder %s26, 2
      %s28 = scalar_select %p27, 0, %s26
      %s29 = sadd.s32 1, %s20
      %s30 = scalar_select %p27, %s29, %s20
      %p31 = scmp.ge.s32.totalorder %s30, 1
      %s32 = scalar_select %p31, 0, %s30
      %s33 = ssub.s32 %s21, %s28
      %s34 = ssub.s32 %s20, %s32
      %s35 = sor.u32 %s33, %s34
      %p36 = scmp.eq.s32.totalorder %s35, 0
      %s38 = sadd.s32 %s37, 1
      %s39 = scalar_select %p36, %s37, %s38
      %p42 = pneg %p36
      %p43 = scmp.eq.s32.totalorder %s13, 1
      %p44 = por %p42, %p43
      %p45 = scmp.ne.s32.totalorder %s37, %s40
      %p46 = scmp.eq.s32.totalorder %s13, 0
      %p47 = por %p45, %p46
      %p48 = scmp.ne.s32.totalorder %s37, %s40
      %p49 = scmp.eq.s32.totalorder %s18, 1
      %p50 = por %p48, %p49
      %p51 = scmp.ne.s32.totalorder %s40, %s41
      %p52 = scmp.eq.s32.totalorder %s18, 0
      %p53 = por %p51, %p52
      %p54 = scmp.ne.s32.totalorder %s40, %s41
      %p55 = scmp.eq.s32.totalorder %s19, 1
      %p56 = por %p54, %p55
      %p58 = scmp.ne.s32.totalorder %s41, %s57
      %p59 = scmp.eq.s32.totalorder %s19, 0
      %p60 = por %p58, %p59
      %s62 = sadd.s32 %s61, 1
      %p65 = scmp.eq.s32.totalorder %s13, 1
      %p66 = scmp.ne.s32.totalorder %s61, %s63
      %p67 = scmp.eq.s32.totalorder %s13, 0
      %p68 = por %p66, %p67
      %p69 = scmp.ne.s32.totalorder %s61, %s63
      %p70 = scmp.eq.s32.totalorder %s18, 1
      %p71 = por %p69, %p70
      %p72 = scmp.ne.s32.totalorder %s63, %s64
      %p73 = scmp.eq.s32.totalorder %s18, 0
      %p74 = por %p72, %p73
      %p75 = scmp.ne.s32.totalorder %s63, %s64
      %p76 = scmp.eq.s32.totalorder %s19, 1
      %p77 = por %p75, %p76
      %p79 = scmp.ne.s32.totalorder %s64, %s78
      %p80 = scmp.eq.s32.totalorder %s19, 0
      %p81 = por %p79, %p80
      %s82 = ssub.s32 %s20, %s32
      %p83 = scmp.eq.s32.totalorder %s82, 0
      %s85 = sadd.s32 %s84, 1
      %s86 = scalar_select %p83, %s84, %s85
      %p89 = pneg %p83
      %p90 = scmp.eq.s32.totalorder %s13, 1
      %p91 = por %p89, %p90
      %p92 = scmp.ne.s32.totalorder %s84, %s87
      %p93 = scmp.eq.s32.totalorder %s13, 0
      %p94 = por %p92, %p93
      %p95 = scmp.ne.s32.totalorder %s84, %s87
      %p96 = scmp.eq.s32.totalorder %s18, 1
      %p97 = por %p95, %p96
      %p98 = scmp.ne.s32.totalorder %s87, %s88
      %p99 = scmp.eq.s32.totalorder %s18, 0
      %p100 = por %p98, %p99
      %p101 = scmp.ne.s32.totalorder %s87, %s88
      %p102 = scmp.eq.s32.totalorder %s19, 1
      %p103 = por %p101, %p102
      %p105 = scmp.ne.s32.totalorder %s88, %s104
      %p106 = scmp.eq.s32.totalorder %s19, 0
      %p107 = por %p105, %p106
      %s108 = ssub.s32 %s21, %s28
      %s109 = ssub.s32 %s20, %s32
      %s110 = sor.u32 %s108, %s109
      %p111 = scmp.eq.s32.totalorder %s110, 0
      %s113 = sadd.s32 %s112, 1
      %s114 = scalar_select %p111, %s112, %s113
      %p117 = pneg %p111
      %p118 = scmp.eq.s32.totalorder %s13, 1
      %p119 = por %p117, %p118
      %p120 = scmp.ne.s32.totalorder %s112, %s115
      %p121 = scmp.eq.s32.totalorder %s13, 0
      %p122 = por %p120, %p121
      %p123 = scmp.ne.s32.totalorder %s112, %s115
      %p124 = scmp.eq.s32.totalorder %s18, 1
      %p125 = por %p123, %p124
      %p126 = scmp.ne.s32.totalorder %s115, %s116
      %p127 = scmp.eq.s32.totalorder %s18, 0
      %p128 = por %p126, %p127
      %p129 = scmp.ne.s32.totalorder %s115, %s116
      %p130 = scmp.eq.s32.totalorder %s19, 1
      %p131 = por %p129, %p130
      %p133 = scmp.ne.s32.totalorder %s116, %s132
      %p134 = scmp.eq.s32.totalorder %s19, 0
      %p135 = por %p133, %p134
      %p136 = scmp.le.s32.totalorder 1, %s13
      %p137 = scmp.lt.s32.totalorder %s13, 3
      %p138 = pnand %p136, %p137
      %p139 = pneg %p138
      // Predicated region
      $region9: #{tpu_custom_call.1} parent=5 // pred_check
        _
      $region10: #{tpu_custom_call.1} parent=5 // pred_check_branch
        %141 = sbr.rel (%p138) target = $region12
      $region11: #{tpu_custom_call.1} parent=5 // pred_region
        %s142 = ssub.s32 %s13, 1
        // Predicated region
        $region13: #{tpu_custom_call.1} parent=11 // pred_check
          %p143 = pneg %p74
        $region14: #{tpu_custom_call.1} parent=11 // pred_check_branch
          %145 = sbr.rel (%p143) target = $region16
        $region15: #{tpu_custom_call.1} parent=11 // pred_region
          %147 = vsyncadd [#allocation3], 0
          %s148 = sshll.u32 %s1, 4
          %s149 = int_to_ptr.hbm [resolvable:$true] %s148
          %s150 = sshll.u32 [#allocation2], 4
          %s151 = int_to_ptr.vmem [resolvable:$true] %s150
          %156 = dma.hbm_to_vmem [thread:$0]  %s149, 6144, %s151, [#allocation3], 64, 64, 4
        $region16: #{tpu_custom_call.1} parent=11 // pred_fallthru
          _
        // Predicated region
        $region17: #{tpu_custom_call.1} parent=11 // pred_check
          %p157 = pneg %p100
        $region18: #{tpu_custom_call.1} parent=11 // pred_check_branch
          %159 = sbr.rel (%p157) target = $region20
        $region19: #{tpu_custom_call.1} parent=11 // pred_region
          %p160 = scmp.lt.s32.totalorder %s22, 0
          %s161 = scalar_select %p160, %s22, 0
          %s162 = smul.addr %s161, 8
          %s163 = scalar_lea.vmem %s2, %s162
        $region20: #{tpu_custom_call.1} parent=11 // pred_fallthru
          _
      $region12: #{tpu_custom_call.1} parent=5 // pred_fallthru
        _
      %p164 = scmp.lt.s32.totalorder %s13, 2
      // Predicated region
      $region21: #{tpu_custom_call.1} parent=5 // pred_check
        %p165 = pneg %p164
      $region22: #{tpu_custom_call.1} parent=5 // pred_check_branch
        %167 = sbr.rel (%p165) target = $region24
      $region23: #{tpu_custom_call.1} parent=5 // pred_region
        // Predicated region
        $region25: #{tpu_custom_call.1} parent=23 // pred_check
          %p168 = pneg %p47
        $region26: #{tpu_custom_call.1} parent=23 // pred_check_branch
          %170 = sbr.rel (%p168) target = $region28
        $region27: #{tpu_custom_call.1} parent=23 // pred_region
          %p171 = scmp.lt.s32.totalorder %s21, 1
          %s172 = scalar_select %p171, %s21, 1
          %p173 = scmp.lt.s32.totalorder %s20, 0
          %s174 = scalar_select %p173, %s20, 0
          %s175 = sadd.s32 %s174, %s172
          %s176 = smul.addr %s175, 8
          %s177 = scalar_lea.vmem %s0, %s176
        $region28: #{tpu_custom_call.1} parent=23 // pred_fallthru
          _
      $region24: #{tpu_custom_call.1} parent=5 // pred_fallthru
        _
      %p178 = scmp.le.s32.totalorder 1, %s13
      %p179 = scmp.lt.s32.totalorder %s13, 3
      %p180 = pnand %p178, %p179
      %p181 = pneg %p180
      // Predicated region
      $region29: #{tpu_custom_call.1} parent=5 // pred_check
        _
      $region30: #{tpu_custom_call.1} parent=5 // pred_check_branch
        %183 = sbr.rel (%p180) target = $region32
      $region31: #{tpu_custom_call.1} parent=5 // pred_region
        %s184 = ssub.s32 %s13, 1
        // Predicated region
        $region33: #{tpu_custom_call.1} parent=31 // pred_check
          %p185 = pneg %p74
        $region34: #{tpu_custom_call.1} parent=31 // pred_check_branch
          %187 = sbr.rel (%p185) target = $region36
        $region35: #{tpu_custom_call.1} parent=31 // pred_region
          %189 = dma.done [#allocation3], 6144
        $region36: #{tpu_custom_call.1} parent=31 // pred_fallthru
          _
        %p190 = scmp.lt.s32.totalorder %s23, 1
        %s191 = scalar_select %p190, %s23, 1
        %p192 = scmp.lt.s32.totalorder %s22, 0
        %s193 = scalar_select %p192, %s22, 0
        %s194 = sadd.s32 %s193, %s191
        %s195 = smul.addr %s194, 8
        %s196 = scalar_lea.vmem %s0, %s195
        %p197 = pneg %p53
        %p198 = pneg %p50
        %p199 = pneg %p74
        %p200 = pneg %p71
        %p201 = scmp.lt.s32.totalorder %s22, 0
        %s202 = scalar_select %p201, %s22, 0
        %s203 = smul.addr %s202, 8
        %s204 = scalar_lea.vmem %s2, %s203
        %p205 = pneg %p100
        %p206 = pneg %p97
        %p207 = pneg %p128
        %p208 = pneg %p125
        %s209 = sand.u32 %s115, 1
        %s210 = scalar_lea.sflag [#allocation4], %s209
        %s211 = sand.u32 %s115, 1
        %s212 = smul.addr %s211, 8
        %s213 = scalar_lea.vmem [#allocation5], %s212
        %p214 = scmp.lt.s32.totalorder %s23, 1
        %s215 = scalar_select %p214, %s23, 1
        %p216 = scmp.lt.s32.totalorder %s22, 0
        %s217 = scalar_select %p216, %s22, 0
        %s218 = sadd.s32 %s217, %s215
        %s219 = smul.addr %s218, 8
        %s220 = scalar_lea.vmem %s0, %s219
        %p221 = scmp.lt.s32.totalorder %s22, 0
        %s222 = scalar_select %p221, %s22, 0
        %s223 = smul.addr %s222, 8
        %s224 = scalar_lea.vmem %s2, %s223
        %v225 = vld [vmem:[%s220] sm:$0xff]
        %v226 = vlaneseq
        %v227 = vand.u32 %v226, 127
        %v228 = vadd.s32 %v227, 128
        %229 = vset.pattern.permute.xlu0 0
        %230 = vperm.xlu0 %229, %v225
        %v231 = vpop.permute.xlu0 %230
        %vm232 = vcmp.eq.s32.totalorder %v227, %v231
        %vm233 = vcmp.eq.s32.totalorder %v228, %v231
        %v234 = vsel %vm232, 1.0, 0.0
        %v235 = vsel %vm233, 1.0, 0.0
        %v236 = vpack.c.bf16 %v234, %v234
        %v237 = vpack.c.bf16 %v235, %v235
        %v238 = vld [vmem:[%s224] sm:$0xff]
        %v239 = vld [vmem:[#allocation2] sm:$0xf]
        %v240 = vld [vmem:[#allocation2 + $0x4] sm:$0xf]
        %v241 = vld [vmem:[#allocation2 + $0x8] sm:$0xf]
        %v242 = vld [vmem:[#allocation2 + $0xc] sm:$0xf]
        %v243 = vld [vmem:[#allocation2 + $0x10] sm:$0xf]
        %v244 = vld [vmem:[#allocation2 + $0x14] sm:$0xf]
        %v245 = vld [vmem:[#allocation2 + $0x18] sm:$0xf]
        %v246 = vld [vmem:[#allocation2 + $0x1c] sm:$0xf]
        %v247 = vld [vmem:[#allocation2 + $0x20] sm:$0xf]
        %v248 = vld [vmem:[#allocation2 + $0x24] sm:$0xf]
        %v249 = vld [vmem:[#allocation2 + $0x28] sm:$0xf]
        %v250 = vld [vmem:[#allocation2 + $0x2c] sm:$0xf]
        %v251 = vld [vmem:[#allocation2 + $0x30] sm:$0xf]
        %v252 = vld [vmem:[#allocation2 + $0x34] sm:$0xf]
        %v253 = vld [vmem:[#allocation2 + $0x38] sm:$0xf]
        %v254 = vld [vmem:[#allocation2 + $0x3c] sm:$0xf]
        %v255 = vld [vmem:[#allocation2 + $0x40] sm:$0xf]
        %v256 = vld [vmem:[#allocation2 + $0x44] sm:$0xf]
        %v257 = vld [vmem:[#allocation2 + $0x48] sm:$0xf]
        %v258 = vld [vmem:[#allocation2 + $0x4c] sm:$0xf]
        %v259 = vld [vmem:[#allocation2 + $0x50] sm:$0xf]
        %v260 = vld [vmem:[#allocation2 + $0x54] sm:$0xf]
        %v261 = vld [vmem:[#allocation2 + $0x58] sm:$0xf]
        %v262 = vld [vmem:[#allocation2 + $0x5c] sm:$0xf]
        %v263 = vld [vmem:[#allocation2 + $0x60] sm:$0xf]
        %v264 = vld [vmem:[#allocation2 + $0x64] sm:$0xf]
        %v265 = vld [vmem:[#allocation2 + $0x68] sm:$0xf]
        %v266 = vld [vmem:[#allocation2 + $0x6c] sm:$0xf]
        %v267 = vld [vmem:[#allocation2 + $0x70] sm:$0xf]
        %v268 = vld [vmem:[#allocation2 + $0x74] sm:$0xf]
        %v269 = vld [vmem:[#allocation2 + $0x78] sm:$0xf]
        %v270 = vld [vmem:[#allocation2 + $0x7c] sm:$0xf]
        %v303 = vunpack.c.l.b16 %v239
        %v304 = vunpack.c.l.b16 %v240
        %v305 = vunpack.c.l.b16 %v241
        %v306 = vunpack.c.l.b16 %v242
        %v307 = vunpack.c.l.b16 %v243
        %v308 = vunpack.c.l.b16 %v244
        %v309 = vunpack.c.l.b16 %v245
        %v310 = vunpack.c.l.b16 %v246
        %v311 = vunpack.c.l.b16 %v247
        %v312 = vunpack.c.l.b16 %v248
        %v313 = vunpack.c.l.b16 %v249
        %v314 = vunpack.c.l.b16 %v250
        %v315 = vunpack.c.l.b16 %v251
        %v316 = vunpack.c.l.b16 %v252
        %v317 = vunpack.c.l.b16 %v253
        %v318 = vunpack.c.l.b16 %v254
        %v319 = vunpack.c.l.b16 %v255
        %v320 = vunpack.c.l.b16 %v256
        %v321 = vunpack.c.l.b16 %v257
        %v322 = vunpack.c.l.b16 %v258
        %v323 = vunpack.c.l.b16 %v259
        %v324 = vunpack.c.l.b16 %v260
        %v325 = vunpack.c.l.b16 %v261
        %v326 = vunpack.c.l.b16 %v262
        %v327 = vunpack.c.l.b16 %v263
        %v328 = vunpack.c.l.b16 %v264
        %v329 = vunpack.c.l.b16 %v265
        %v330 = vunpack.c.l.b16 %v266
        %v331 = vunpack.c.l.b16 %v267
        %v332 = vunpack.c.l.b16 %v268
        %v333 = vunpack.c.l.b16 %v269
        %v334 = vunpack.c.l.b16 %v270
        %v335 = vpack.c.b16 %v304, %v303
        %v336 = vpack.c.b16 %v306, %v305
        %v337 = vpack.c.b16 %v308, %v307
        %v338 = vpack.c.b16 %v310, %v309
        %v339 = vpack.c.b16 %v312, %v311
        %v340 = vpack.c.b16 %v314, %v313
        %v341 = vpack.c.b16 %v316, %v315
        %v342 = vpack.c.b16 %v318, %v317
        %v343 = vpack.c.b16 %v320, %v319
        %v344 = vpack.c.b16 %v322, %v321
        %v345 = vpack.c.b16 %v324, %v323
        %v346 = vpack.c.b16 %v326, %v325
        %v347 = vpack.c.b16 %v328, %v327
        %v348 = vpack.c.b16 %v330, %v329
        %v349 = vpack.c.b16 %v332, %v331
        %v350 = vpack.c.b16 %v334, %v333
        %367 = vmatpush.bf16.msra.mxu0 %v342
        %368 = vmatpush.bf16.msra.mxu0 %v341
        %369 = vmatpush.bf16.msra.mxu0 %v340
        %370 = vmatpush.bf16.msra.mxu0 %v339
        %371 = vmatpush.bf16.msra.mxu0 %v338
        %372 = vmatpush.bf16.msra.mxu0 %v337
        %373 = vmatpush.bf16.msra.mxu0 %v336
        %374 = vmatpush.bf16.msra.mxu0 %v335
        %375 = vmatmul.bf16.gmra.mxu0 %v236
        %v376 = vpop.f32.mrf.mxu0
        %v377 = vadd.f32 0.0, %v376
        %v378 = vpop.f32.mrf.mxu0
        %379 = vdwg.mxu0
        %380 = vmatpush.bf16.msra.mxu0 %v350
        %381 = vmatpush.bf16.msra.mxu0 %v349
        %382 = vmatpush.bf16.msra.mxu0 %v348
        %383 = vmatpush.bf16.msra.mxu0 %v347
        %384 = vmatpush.bf16.msra.mxu0 %v346
        %385 = vmatpush.bf16.msra.mxu0 %v345
        %386 = vmatpush.bf16.msra.mxu0 %v344
        %387 = vmatpush.bf16.msra.mxu0 %v343
        %388 = vmatmul.bf16.gmra.mxu0 %v237
        %v389 = vpop.f32.mrf.mxu0
        %v390 = vadd.f32 %v377, %v389
        %v391 = vpop.f32.mrf.mxu0
        %392 = vdwg.mxu0
        %v393 = vadd.f32 %v238, %v390
        %s394 = scalar_lea.vmem [#allocation2], 128
        %v395 = vld [vmem:[%s394] sm:$0xf]
        %v396 = vld [vmem:[%s394 + $0x4] sm:$0xf]
        %v397 = vld [vmem:[%s394 + $0x8] sm:$0xf]
        %v398 = vld [vmem:[%s394 + $0xc] sm:$0xf]
        %v399 = vld [vmem:[%s394 + $0x10] sm:$0xf]
        %v400 = vld [vmem:[%s394 + $0x14] sm:$0xf]
        %v401 = vld [vmem:[%s394 + $0x18] sm:$0xf]
        %v402 = vld [vmem:[%s394 + $0x1c] sm:$0xf]
        %v403 = vld [vmem:[%s394 + $0x20] sm:$0xf]
        %v404 = vld [vmem:[%s394 + $0x24] sm:$0xf]
        %v405 = vld [vmem:[%s394 + $0x28] sm:$0xf]
        %v406 = vld [vmem:[%s394 + $0x2c] sm:$0xf]
        %v407 = vld [vmem:[%s394 + $0x30] sm:$0xf]
        %v408 = vld [vmem:[%s394 + $0x34] sm:$0xf]
        %v409 = vld [vmem:[%s394 + $0x38] sm:$0xf]
        %v410 = vld [vmem:[%s394 + $0x3c] sm:$0xf]
        %v411 = vld [vmem:[%s394 + $0x40] sm:$0xf]
        %v412 = vld [vmem:[%s394 + $0x44] sm:$0xf]
        %v413 = vld [vmem:[%s394 + $0x48] sm:$0xf]
        %v414 = vld [vmem:[%s394 + $0x4c] sm:$0xf]
        %v415 = vld [vmem:[%s394 + $0x50] sm:$0xf]
        %v416 = vld [vmem:[%s394 + $0x54] sm:$0xf]
        %v417 = vld [vmem:[%s394 + $0x58] sm:$0xf]
        %v418 = vld [vmem:[%s394 + $0x5c] sm:$0xf]
        %v419 = vld [vmem:[%s394 + $0x60] sm:$0xf]
        %v420 = vld [vmem:[%s394 + $0x64] sm:$0xf]
        %v421 = vld [vmem:[%s394 + $0x68] sm:$0xf]
        %v422 = vld [vmem:[%s394 + $0x6c] sm:$0xf]
        %v423 = vld [vmem:[%s394 + $0x70] sm:$0xf]
        %v424 = vld [vmem:[%s394 + $0x74] sm:$0xf]
        %v425 = vld [vmem:[%s394 + $0x78] sm:$0xf]
        %v426 = vld [vmem:[%s394 + $0x7c] sm:$0xf]
        %v459 = vunpack.c.l.b16 %v395
        %v460 = vunpack.c.l.b16 %v396
        %v461 = vunpack.c.l.b16 %v397
        %v462 = vunpack.c.l.b16 %v398
        %v463 = vunpack.c.l.b16 %v399
        %v464 = vunpack.c.l.b16 %v400
        %v465 = vunpack.c.l.b16 %v401
        %v466 = vunpack.c.l.b16 %v402
        %v467 = vunpack.c.l.b16 %v403
        %v468 = vunpack.c.l.b16 %v404
        %v469 = vunpack.c.l.b16 %v405
        %v470 = vunpack.c.l.b16 %v406
        %v471 = vunpack.c.l.b16 %v407
        %v472 = vunpack.c.l.b16 %v408
        %v473 = vunpack.c.l.b16 %v409
        %v474 = vunpack.c.l.b16 %v410
        %v475 = vunpack.c.l.b16 %v411
        %v476 = vunpack.c.l.b16 %v412
        %v477 = vunpack.c.l.b16 %v413
        %v478 = vunpack.c.l.b16 %v414
        %v479 = vunpack.c.l.b16 %v415
        %v480 = vunpack.c.l.b16 %v416
        %v481 = vunpack.c.l.b16 %v417
        %v482 = vunpack.c.l.b16 %v418
        %v483 = vunpack.c.l.b16 %v419
        %v484 = vunpack.c.l.b16 %v420
        %v485 = vunpack.c.l.b16 %v421
        %v486 = vunpack.c.l.b16 %v422
        %v487 = vunpack.c.l.b16 %v423
        %v488 = vunpack.c.l.b16 %v424
        %v489 = vunpack.c.l.b16 %v425
        %v490 = vunpack.c.l.b16 %v426
        %v491 = vpack.c.b16 %v460, %v459
        %v492 = vpack.c.b16 %v462, %v461
        %v493 = vpack.c.b16 %v464, %v463
        %v494 = vpack.c.b16 %v466, %v465
        %v495 = vpack.c.b16 %v468, %v467
        %v496 = vpack.c.b16 %v470, %v469
        %v497 = vpack.c.b16 %v472, %v471
        %v498 = vpack.c.b16 %v474, %v473
        %v499 = vpack.c.b16 %v476, %v475
        %v500 = vpack.c.b16 %v478, %v477
        %v501 = vpack.c.b16 %v480, %v479
        %v502 = vpack.c.b16 %v482, %v481
        %v503 = vpack.c.b16 %v484, %v483
        %v504 = vpack.c.b16 %v486, %v485
        %v505 = vpack.c.b16 %v488, %v487
        %v506 = vpack.c.b16 %v490, %v489
        %523 = vmatpush.bf16.msra.mxu0 %v498
        %524 = vmatpush.bf16.msra.mxu0 %v497
        %525 = vmatpush.bf16.msra.mxu0 %v496
        %526 = vmatpush.bf16.msra.mxu0 %v495
        %527 = vmatpush.bf16.msra.mxu0 %v494
        %528 = vmatpush.bf16.msra.mxu0 %v493
        %529 = vmatpush.bf16.msra.mxu0 %v492
        %530 = vmatpush.bf16.msra.mxu0 %v491
        %531 = vmatmul.bf16.gmra.mxu0 %v236
        %v532 = vpop.f32.mrf.mxu0
        %v533 = vadd.f32 0.0, %v532
        %v534 = vpop.f32.mrf.mxu0
        %535 = vdwg.mxu0
        %536 = vmatpush.bf16.msra.mxu0 %v506
        %537 = vmatpush.bf16.msra.mxu0 %v505
        %538 = vmatpush.bf16.msra.mxu0 %v504
        %539 = vmatpush.bf16.msra.mxu0 %v503
        %540 = vmatpush.bf16.msra.mxu0 %v502
        %541 = vmatpush.bf16.msra.mxu0 %v501
        %542 = vmatpush.bf16.msra.mxu0 %v500
        %543 = vmatpush.bf16.msra.mxu0 %v499
        %544 = vmatmul.bf16.gmra.mxu0 %v237
        %v545 = vpop.f32.mrf.mxu0
        %v546 = vadd.f32 %v533, %v545
        %v547 = vpop.f32.mrf.mxu0
        %548 = vdwg.mxu0
        %v549 = vadd.f32 %v393, %v546
        %s550 = scalar_lea.vmem [#allocation2], 256
        %v551 = vld [vmem:[%s550] sm:$0xf]
        %v552 = vld [vmem:[%s550 + $0x4] sm:$0xf]
        %v553 = vld [vmem:[%s550 + $0x8] sm:$0xf]
        %v554 = vld [vmem:[%s550 + $0xc] sm:$0xf]
        %v555 = vld [vmem:[%s550 + $0x10] sm:$0xf]
        %v556 = vld [vmem:[%s550 + $0x14] sm:$0xf]
        %v557 = vld [vmem:[%s550 + $0x18] sm:$0xf]
        %v558 = vld [vmem:[%s550 + $0x1c] sm:$0xf]
        %v559 = vld [vmem:[%s550 + $0x20] sm:$0xf]
        %v560 = vld [vmem:[%s550 + $0x24] sm:$0xf]
        %v561 = vld [vmem:[%s550 + $0x28] sm:$0xf]
        %v562 = vld [vmem:[%s550 + $0x2c] sm:$0xf]
        %v563 = vld [vmem:[%s550 + $0x30] sm:$0xf]
        %v564 = vld [vmem:[%s550 + $0x34] sm:$0xf]
        %v565 = vld [vmem:[%s550 + $0x38] sm:$0xf]
        %v566 = vld [vmem:[%s550 + $0x3c] sm:$0xf]
        %v567 = vld [vmem:[%s550 + $0x40] sm:$0xf]
        %v568 = vld [vmem:[%s550 + $0x44] sm:$0xf]
        %v569 = vld [vmem:[%s550 + $0x48] sm:$0xf]
        %v570 = vld [vmem:[%s550 + $0x4c] sm:$0xf]
        %v571 = vld [vmem:[%s550 + $0x50] sm:$0xf]
        %v572 = vld [vmem:[%s550 + $0x54] sm:$0xf]
        %v573 = vld [vmem:[%s550 + $0x58] sm:$0xf]
        %v574 = vld [vmem:[%s550 + $0x5c] sm:$0xf]
        %v575 = vld [vmem:[%s550 + $0x60] sm:$0xf]
        %v576 = vld [vmem:[%s550 + $0x64] sm:$0xf]
        %v577 = vld [vmem:[%s550 + $0x68] sm:$0xf]
        %v578 = vld [vmem:[%s550 + $0x6c] sm:$0xf]
        %v579 = vld [vmem:[%s550 + $0x70] sm:$0xf]
        %v580 = vld [vmem:[%s550 + $0x74] sm:$0xf]
        %v581 = vld [vmem:[%s550 + $0x78] sm:$0xf]
        %v582 = vld [vmem:[%s550 + $0x7c] sm:$0xf]
        %v615 = vunpack.c.l.b16 %v551
        %v616 = vunpack.c.l.b16 %v552
        %v617 = vunpack.c.l.b16 %v553
        %v618 = vunpack.c.l.b16 %v554
        %v619 = vunpack.c.l.b16 %v555
        %v620 = vunpack.c.l.b16 %v556
        %v621 = vunpack.c.l.b16 %v557
        %v622 = vunpack.c.l.b16 %v558
        %v623 = vunpack.c.l.b16 %v559
        %v624 = vunpack.c.l.b16 %v560
        %v625 = vunpack.c.l.b16 %v561
        %v626 = vunpack.c.l.b16 %v562
        %v627 = vunpack.c.l.b16 %v563
        %v628 = vunpack.c.l.b16 %v564
        %v629 = vunpack.c.l.b16 %v565
        %v630 = vunpack.c.l.b16 %v566
        %v631 = vunpack.c.l.b16 %v567
        %v632 = vunpack.c.l.b16 %v568
        %v633 = vunpack.c.l.b16 %v569
        %v634 = vunpack.c.l.b16 %v570
        %v635 = vunpack.c.l.b16 %v571
        %v636 = vunpack.c.l.b16 %v572
        %v637 = vunpack.c.l.b16 %v573
        %v638 = vunpack.c.l.b16 %v574
        %v639 = vunpack.c.l.b16 %v575
        %v640 = vunpack.c.l.b16 %v576
        %v641 = vunpack.c.l.b16 %v577
        %v642 = vunpack.c.l.b16 %v578
        %v643 = vunpack.c.l.b16 %v579
        %v644 = vunpack.c.l.b16 %v580
        %v645 = vunpack.c.l.b16 %v581
        %v646 = vunpack.c.l.b16 %v582
        %v647 = vpack.c.b16 %v616, %v615
        %v648 = vpack.c.b16 %v618, %v617
        %v649 = vpack.c.b16 %v620, %v619
        %v650 = vpack.c.b16 %v622, %v621
        %v651 = vpack.c.b16 %v624, %v623
        %v652 = vpack.c.b16 %v626, %v625
        %v653 = vpack.c.b16 %v628, %v627
        %v654 = vpack.c.b16 %v630, %v629
        %v655 = vpack.c.b16 %v632, %v631
        %v656 = vpack.c.b16 %v634, %v633
        %v657 = vpack.c.b16 %v636, %v635
        %v658 = vpack.c.b16 %v638, %v637
        %v659 = vpack.c.b16 %v640, %v639
        %v660 = vpack.c.b16 %v642, %v641
        %v661 = vpack.c.b16 %v644, %v643
        %v662 = vpack.c.b16 %v646, %v645
        %679 = vmatpush.bf16.msra.mxu0 %v654
        %680 = vmatpush.bf16.msra.mxu0 %v653
        %681 = vmatpush.bf16.msra.mxu0 %v652
        %682 = vmatpush.bf16.msra.mxu0 %v651
        %683 = vmatpush.bf16.msra.mxu0 %v650
        %684 = vmatpush.bf16.msra.mxu0 %v649
        %685 = vmatpush.bf16.msra.mxu0 %v648
        %686 = vmatpush.bf16.msra.mxu0 %v647
        %687 = vmatmul.bf16.gmra.mxu0 %v236
        %v688 = vpop.f32.mrf.mxu0
        %v689 = vadd.f32 0.0, %v688
        %v690 = vpop.f32.mrf.mxu0
        %691 = vdwg.mxu0
        %692 = vmatpush.bf16.msra.mxu0 %v662
        %693 = vmatpush.bf16.msra.mxu0 %v661
        %694 = vmatpush.bf16.msra.mxu0 %v660
        %695 = vmatpush.bf16.msra.mxu0 %v659
        %696 = vmatpush.bf16.msra.mxu0 %v658
        %697 = vmatpush.bf16.msra.mxu0 %v657
        %698 = vmatpush.bf16.msra.mxu0 %v656
        %699 = vmatpush.bf16.msra.mxu0 %v655
        %700 = vmatmul.bf16.gmra.mxu0 %v237
        %v701 = vpop.f32.mrf.mxu0
        %v702 = vadd.f32 %v689, %v701
        %v703 = vpop.f32.mrf.mxu0
        %704 = vdwg.mxu0
        %v705 = vadd.f32 %v549, %v702
        %706 = vst [vmem:[%s213] sm:$0xff] %v705
        %s707 = sand.u32 %s115, 1
        %s708 = scalar_lea.sflag [#allocation4], %s707
        %s709 = sand.u32 %s115, 1
        %s710 = smul.addr %s709, 8
        %s711 = scalar_lea.vmem [#allocation5], %s710
        // Predicated region
        $region37: #{tpu_custom_call.1} parent=31 // pred_check
          %p712 = pneg %p125
        $region38: #{tpu_custom_call.1} parent=31 // pred_check_branch
          %714 = sbr.rel (%p712) target = $region40
        $region39: #{tpu_custom_call.1} parent=31 // pred_region
          %716 = vsyncadd %s708, 0
          %s717 = sadd.s32 %s22, %s23
          %s718 = smul.addr %s717, 8
          %s719 = scalar_lea.hbm %s3, %s718
          %s721 = sshll.u32 %s711, 4
          %s722 = int_to_ptr.vmem [resolvable:$true] %s721
          %s723 = sshll.u32 %s719, 4
          %s724 = int_to_ptr.hbm [resolvable:$true] %s723
          %726 = dma.vmem_to_hbm [thread:$0]  %s722, 128, %s724, %s708
        $region40: #{tpu_custom_call.1} parent=31 // pred_fallthru
          _
      $region32: #{tpu_custom_call.1} parent=5 // pred_fallthru
        _
      %p727 = scmp.le.s32.totalorder 2, %s13
      // Predicated region
      $region41: #{tpu_custom_call.1} parent=5 // pred_check
        %p728 = pneg %p727
      $region42: #{tpu_custom_call.1} parent=5 // pred_check_branch
        %730 = sbr.rel (%p728) target = $region44
      $region43: #{tpu_custom_call.1} parent=5 // pred_region
        %s731 = ssub.s32 %s13, 2
        // Predicated region
        $region45: #{tpu_custom_call.1} parent=43 // pred_check
          %p732 = pneg %p131
        $region46: #{tpu_custom_call.1} parent=43 // pred_check_branch
          %734 = sbr.rel (%p732) target = $region48
        $region47: #{tpu_custom_call.1} parent=43 // pred_region
          %s735 = sand.u32 %s116, 1
          %s736 = scalar_lea.sflag [#allocation4], %s735
          %s737 = sand.u32 %s116, 1
          %s738 = smul.addr %s737, 8
          %s739 = scalar_lea.vmem [#allocation5], %s738
          %741 = dma.done %s736, 128
        $region48: #{tpu_custom_call.1} parent=43 // pred_fallthru
          _
      $region44: #{tpu_custom_call.1} parent=5 // pred_fallthru
        _
    $region6: #{tpu_custom_call.1} parent=1 // loop_footer
      %s17 = sadd.s32 1, %s13
    $region7: #{tpu_custom_call.1} parent=1 // loop_footer_branch
      %12 = sbr.rel target = $region3
    $region8: #{tpu_custom_call.1} parent=1 // loop_exit
      _
    %742 = vsyncpa [#allocation3], 1
    %s743 = scalar_lea.sflag [#allocation3], 1
    %744 = vsyncpa %s743, 1
    %745 = vsyncpa [#allocation4], 1
    %s746 = scalar_lea.sflag [#allocation4], 1
    %747 = vsyncpa %s746, 1

</llo_original>
